<compile_context>
chip_gen: v7x
topology: tpu7x:2x2x1
jax: 0.10.0
libtpu: 0.0.40
codegen_flags: <defaults>
</compile_context>

<pallas_src>
import jax
import jax.numpy as jnp
from jax.experimental import pallas as pl
from jax.experimental.pallas import tpu as pltpu

_LANE = 128  # vreg lane width


def _round_up(v, m):
    return (v + m - 1) // m * m


def _cdiv(a, b):
    return (a + b - 1) // b


def _sublane(dtype):
    # Sublane multiple per dtype: f32 -> 8, bf16 -> 16, int8/fp8 -> 32.
    return max(8, 32 // jnp.dtype(dtype).itemsize)


def _chip_config():
    """Per-generation tiling knobs, derived from VMEM capacity.

    v5e/v6e: 128 MiB VMEM, single TensorCore -> big tiles, no forced split.
    v7x:     64 MiB VMEM per TC, two TCs     -> modest working set, >= 4
             grid steps so each core gets >= 2 iterations of overlap.
    Falls back to the conservative (v7x-safe) settings if the query fails.
    """
    vmem = None
    try:
        info = pltpu.get_tpu_info()
        vmem = int(getattr(info, "vmem_capacity_bytes", 0)) or None
    except Exception:
        vmem = None
    if vmem is not None and vmem > (64 << 20):
        # v5e / v6e class chip.
        return {"budget": 56 << 20, "max_tm": 8192, "target_steps": 1,
                "limit_cap": 96 << 20}
    # v7x class chip (or unknown -> conservative defaults safe everywhere).
    return {"budget": 24 << 20, "max_tm": 2048, "target_steps": 4,
            "limit_cap": 40 << 20}


def gatenu_kernel(x_ref, w1_ref, b1_ref, w2_ref, b2_ref, o_ref):
    # Hidden layer: Linear -> ReLU   (Dropout is identity at inference).
    h = jnp.dot(x_ref[...], w1_ref[...], preferred_element_type=jnp.float32)
    h = jnp.maximum(h + b1_ref[...].astype(jnp.float32), 0.0)   # (tm,H)+(1,H)
    # Output layer: Linear -> 2 * Sigmoid.
    y = jnp.dot(h.astype(w2_ref.dtype), w2_ref[...],
                preferred_element_type=jnp.float32)
    y = y + b2_ref[...].astype(jnp.float32)                     # (tm,O)+(1,O)
    # 2*sigmoid(y) = 2 / (1 + exp(-y)); exp + approximate reciprocal both
    # execute on the EUP slot, freeing the VALUs (kernel is DMA-bound anyway).
    gate = 2.0 * pl.reciprocal(1.0 + jnp.exp(-y), approx=True)
    o_ref[...] = gate.astype(o_ref.dtype)


def _choose_tm(batch, in_dim, hidden, out_dim, x_dtype, w_dtype, o_dtype, cfg):
    """Pick the batch-tile size from the VMEM budget (lane-padding aware)."""
    xb = jnp.dtype(x_dtype).itemsize
    wb = jnp.dtype(w_dtype).itemsize
    ob = jnp.dtype(o_dtype).itemsize
    sub = max(_sublane(x_dtype), _sublane(o_dtype))
    sub_w = _sublane(w_dtype)

    # VMEM layouts lane-pad the last dim to 128.
    in_l = _round_up(in_dim, _LANE)
    hid_l = _round_up(hidden, _LANE)
    out_l = _round_up(out_dim, _LANE)

    # Weights/biases as resident in VMEM.  BlockSpec double-buffers them even
    # though their constant index_map means they are DMA'd only once.
    weight_bytes = 2 * wb * (
        _round_up(in_dim, sub_w) * hid_l + sub_w * hid_l
        + _round_up(hidden, sub_w) * out_l + sub_w * out_l)

    # Per batch-row resident bytes: double-buffered x / out tiles (lane padded)
    # plus the f32 temporaries for the hidden activations and the logits.
    per_row = (2 * in_l * xb + 2 * out_l * ob + 4 * (hid_l + out_l))

    avail = max(cfg["budget"] - weight_bytes, per_row * sub)
    tm = int(avail // per_row)
    tm = max(sub, min(tm, cfg["max_tm"], _round_up(batch, sub)))
    if cfg["target_steps"] > 1:
        # Give each TensorCore >= 2 grid steps on megacore (v7x) chips.
        tm = min(tm, _round_up(_cdiv(batch, cfg["target_steps"]), sub))

    if tm >= batch:
        # Single step; a full-extent block is always layout-legal.
        tm = batch
    else:
        tm = max(sub, (tm // sub) * sub)
        # Rebalance so the chosen number of steps splits the batch evenly-ish
        # (minimizes the clipped tail of the last block).
        steps = _cdiv(batch, tm)
        tm = _round_up(_cdiv(batch, steps), sub)
    return tm, weight_bytes, per_row


@jax.jit
def gatenu_forward(x, w1, b1, w2, b2):
    """x: (B, input_dim); w1: (input_dim, hidden); w2: (hidden, output).

    Dtype-agnostic: feed x / W1 / W2 (and thus the output) as bf16 on
    v6e/v7x for ~2x HBM-traffic savings; accumulation and the nonlinear
    tail stay in f32.
    """
    B, in_dim = x.shape
    hidden = w1.shape[1]
    out_dim = w2.shape[1]
    out_dtype = x.dtype

    cfg = _chip_config()
    tm, weight_bytes, per_row = _choose_tm(
        B, in_dim, hidden, out_dim, x.dtype, w1.dtype, out_dtype, cfg)

    b1_2d = b1.reshape(1, hidden)
    b2_2d = b2.reshape(1, out_dim)

    # Ragged batches: no padding/copies — Pallas clips the last block on both
    # the x read and the output write; compute is row-independent.
    grid = (_cdiv(B, tm),)

    vmem_limit = int(min(max(weight_bytes + tm * per_row + (2 << 20), 16 << 20),
                         cfg["limit_cap"]))

    cost = pl.CostEstimate(
        flops=2 * B * (in_dim * hidden + hidden * out_dim),
        transcendentals=B * out_dim,
        bytes_accessed=(B * in_dim * jnp.dtype(x.dtype).itemsize
                        + (in_dim * hidden + hidden + hidden * out_dim + out_dim)
                        * jnp.dtype(w1.dtype).itemsize
                        + B * out_dim * jnp.dtype(out_dtype).itemsize))

    out = pl.pallas_call(
        gatenu_kernel,
        out_shape=jax.ShapeDtypeStruct((B, out_dim), out_dtype),
        grid_spec=pltpu.PrefetchScalarGridSpec(
            num_scalar_prefetch=0,
            grid=grid,
            in_specs=[
                pl.BlockSpec((tm, in_dim), lambda i: (i, 0)),        # x tile
                # Constant index maps: weights/biases are DMA'd only once.
                pl.BlockSpec((in_dim, hidden), lambda i: (0, 0)),    # W1
                pl.BlockSpec((1, hidden), lambda i: (0, 0)),         # b1
                pl.BlockSpec((hidden, out_dim), lambda i: (0, 0)),   # W2
                pl.BlockSpec((1, out_dim), lambda i: (0, 0)),        # b2
            ],
            out_specs=pl.BlockSpec((tm, out_dim), lambda i: (i, 0)),
        ),
        compiler_params=pltpu.CompilerParams(
            dimension_semantics=("parallel",),
            vmem_limit_bytes=vmem_limit),
        cost_estimate=cost,
    )(x, w1, b1_2d, w2, b2_2d)
    return out


def init_gatenu_params(key, input_dim, hidden_dim, output_dim, dtype=jnp.float32):
    """Deterministic PyTorch-Linear-style init (uniform +-1/sqrt(fan_in))."""
    k1, k2, k3, k4 = jax.random.split(key, 4)
    lim1 = 1.0 / jnp.sqrt(input_dim)
    lim2 = 1.0 / jnp.sqrt(hidden_dim)
    w1 = jax.random.uniform(k1, (input_dim, hidden_dim), dtype, -lim1, lim1)
    b1 = jax.random.uniform(k2, (hidden_dim,), dtype, -lim1, lim1)
    w2 = jax.random.uniform(k3, (hidden_dim, output_dim), dtype, -lim2, lim2)
    b2 = jax.random.uniform(k4, (output_dim,), dtype, -lim2, lim2)
    return w1, b1, w2, b2


if __name__ == "__main__":
    # Small shapes consistent with GateNU(input_dim, hidden_dim, output_dim).
    batch, input_dim, hidden_dim, output_dim = 8, 32, 64, 32

    key = jax.random.PRNGKey(0)
    kx, kp = jax.random.split(key)
    x = jax.random.normal(kx, (batch, input_dim), dtype=jnp.float32)
    w1, b1, w2, b2 = init_gatenu_params(kp, input_dim, hidden_dim, output_dim)

    # --- f32 path: tight correctness check against a pure-JAX reference ---
    out = gatenu_forward(x, w1, b1, w2, b2)
    out = jax.block_until_ready(out)
    ref = 2.0 * jax.nn.sigmoid(jnp.maximum(x @ w1 + b1, 0.0) @ w2 + b2)
    assert out.shape == (batch, output_dim)
    # Tolerance loosened for the EUP approximate reciprocal (~2^-12 rel err).
    assert jnp.allclose(out, ref, atol=2e-3, rtol=2e-3)

    # --- bf16 I/O path (the recommended HBM-saving configuration) ---
    out_bf16 = gatenu_forward(x.astype(jnp.bfloat16),
                              w1.astype(jnp.bfloat16), b1.astype(jnp.bfloat16),
                              w2.astype(jnp.bfloat16), b2.astype(jnp.bfloat16))
    out_bf16 = jax.block_until_ready(out_bf16)
    assert out_bf16.shape == (batch, output_dim)
    assert jnp.allclose(out_bf16.astype(jnp.float32), ref, atol=3e-2, rtol=3e-2)

    print("KERNEL_OK")
</pallas_src>

<mosaic_0001>
module attributes {stable_mosaic.version = 11 : i64} {
  func.func @gatenu_kernel(%arg0: i32, %arg1: memref<8x32xf32, #tpu.memory_space<vmem>>, %arg2: memref<32x64xf32, #tpu.memory_space<vmem>>, %arg3: memref<1x64xf32, #tpu.memory_space<vmem>>, %arg4: memref<64x32xf32, #tpu.memory_space<vmem>>, %arg5: memref<1x32xf32, #tpu.memory_space<vmem>>, %arg6: memref<8x32xf32, #tpu.memory_space<vmem>>) attributes {dimension_semantics = [#tpu.dimension_semantics<parallel>], iteration_bounds = array<i64: 1>, scalar_prefetch = 0 : i64, scratch_operands = 0 : i64, tpu.core_type = #tpu.core_type<tc>, window_params = [{transform_indices = @transform_0, window_bounds = array<i64: 8, 32>}, {pipeline_mode = #tpu.pipeline_mode<synchronous>, transform_indices = @transform_1, window_bounds = array<i64: 32, 64>}, {pipeline_mode = #tpu.pipeline_mode<synchronous>, transform_indices = @transform_2, window_bounds = array<i64: 1, 64>}, {pipeline_mode = #tpu.pipeline_mode<synchronous>, transform_indices = @transform_3, window_bounds = array<i64: 64, 32>}, {pipeline_mode = #tpu.pipeline_mode<synchronous>, transform_indices = @transform_4, window_bounds = array<i64: 1, 32>}, {transform_indices = @transform_5, window_bounds = array<i64: 8, 32>}]} {
    %c0 = arith.constant 0 : index
    %c0_0 = arith.constant 0 : index
    %0 = vector.load %arg1[%c0, %c0_0] : memref<8x32xf32, #tpu.memory_space<vmem>>, vector<8x32xf32>
    %c0_1 = arith.constant 0 : index
    %c0_2 = arith.constant 0 : index
    %1 = vector.load %arg2[%c0_1, %c0_2] : memref<32x64xf32, #tpu.memory_space<vmem>>, vector<32x64xf32>
    %cst = arith.constant dense<0.000000e+00> : vector<8x64xf32>
    %2 = tpu.matmul %0, %1, %cst {dimension_numbers = #tpu.dot_dimension_numbers<[1], [0], [0], [1], [0, 0, 1, 1], [], []>} : vector<8x32xf32>, vector<32x64xf32>, vector<8x64xf32> -> vector<8x64xf32>
    %c0_3 = arith.constant 0 : index
    %c0_4 = arith.constant 0 : index
    %3 = vector.load %arg3[%c0_3, %c0_4] : memref<1x64xf32, #tpu.memory_space<vmem>>, vector<1x64xf32>
    %4 = vector.broadcast %3 : vector<1x64xf32> to vector<8x64xf32>
    %5 = arith.addf %2, %4 : vector<8x64xf32>
    %cst_5 = arith.constant 0.000000e+00 : f32
    %6 = vector.broadcast %cst_5 : f32 to vector<8x64xf32>
    %7 = arith.maximumf %5, %6 : vector<8x64xf32>
    %c0_6 = arith.constant 0 : index
    %c0_7 = arith.constant 0 : index
    %8 = vector.load %arg4[%c0_6, %c0_7] : memref<64x32xf32, #tpu.memory_space<vmem>>, vector<64x32xf32>
    %cst_8 = arith.constant dense<0.000000e+00> : vector<8x32xf32>
    %9 = tpu.matmul %7, %8, %cst_8 {dimension_numbers = #tpu.dot_dimension_numbers<[1], [0], [0], [1], [0, 0, 1, 1], [], []>} : vector<8x64xf32>, vector<64x32xf32>, vector<8x32xf32> -> vector<8x32xf32>
    %c0_9 = arith.constant 0 : index
    %c0_10 = arith.constant 0 : index
    %10 = vector.load %arg5[%c0_9, %c0_10] : memref<1x32xf32, #tpu.memory_space<vmem>>, vector<1x32xf32>
    %11 = vector.broadcast %10 : vector<1x32xf32> to vector<8x32xf32>
    %12 = arith.addf %9, %11 : vector<8x32xf32>
    %cst_11 = arith.constant 0.000000e+00 : f32
    %13 = vector.broadcast %cst_11 : f32 to vector<8x32xf32>
    %14 = arith.subf %13, %12 : vector<8x32xf32>
    %15 = math.exp %14 : vector<8x32xf32>
    %cst_12 = arith.constant 1.000000e+00 : f32
    %16 = vector.broadcast %cst_12 : f32 to vector<8x32xf32>
    %17 = arith.addf %16, %15 : vector<8x32xf32>
    %18 = tpu.reciprocal %17 {approx = true} : vector<8x32xf32> -> vector<8x32xf32>
    %cst_13 = arith.constant 2.000000e+00 : f32
    %19 = vector.broadcast %cst_13 : f32 to vector<8x32xf32>
    %20 = arith.mulf %19, %18 : vector<8x32xf32>
    %c0_14 = arith.constant 0 : index
    %c0_15 = arith.constant 0 : index
    %21 = vector.load %arg6[%c0_14, %c0_15] : memref<8x32xf32, #tpu.memory_space<vmem>>, vector<8x32xf32>
    tpu.vector_store %arg6[%c0_14, %c0_15], %20 {strides = array<i32>} : memref<8x32xf32, #tpu.memory_space<vmem>>, vector<8x32xf32>,
    return
  }
  func.func @transform_0(%arg0: i32) -> (i32, i32) {
    %c0_i32 = arith.constant 0 : i32
    %c0_i32_0 = arith.constant 0 : i32
    return %arg0, %c0_i32 : i32, i32
  }
  func.func @transform_1(%arg0: i32) -> (i32, i32) {
    %c0_i32 = arith.constant 0 : i32
    %c0_i32_0 = arith.constant 0 : i32
    %c0_i32_1 = arith.constant 0 : i32
    return %c0_i32, %c0_i32_0 : i32, i32
  }
  func.func @transform_2(%arg0: i32) -> (i32, i32) {
    %c0_i32 = arith.constant 0 : i32
    %c0_i32_0 = arith.constant 0 : i32
    %c0_i32_1 = arith.constant 0 : i32
    return %c0_i32, %c0_i32_0 : i32, i32
  }
  func.func @transform_3(%arg0: i32) -> (i32, i32) {
    %c0_i32 = arith.constant 0 : i32
    %c0_i32_0 = arith.constant 0 : i32
    %c0_i32_1 = arith.constant 0 : i32
    return %c0_i32, %c0_i32_0 : i32, i32
  }
  func.func @transform_4(%arg0: i32) -> (i32, i32) {
    %c0_i32 = arith.constant 0 : i32
    %c0_i32_0 = arith.constant 0 : i32
    %c0_i32_1 = arith.constant 0 : i32
    return %c0_i32, %c0_i32_0 : i32, i32
  }
  func.func @transform_5(%arg0: i32) -> (i32, i32) {
    %c0_i32 = arith.constant 0 : i32
    %c0_i32_0 = arith.constant 0 : i32
    return %arg0, %c0_i32 : i32, i32
  }
}

</mosaic_0001>

<llo_original>
// kernel: gatenu_forward.1
$region0: #{gatenu_forward.1}
  #allocation0 [shape = 'u32[]', space=smem, size = 0x4, offset = 0x4, fixed_abs, tag = 'smem constant byte address 0x4 - core index']
  #allocation1 [shape = 'u32[144,128]{1,0:T(1,128)}', space=vmem, size = 0x12000, scoped, tag = 'internal scratch']
  %s0 = inlined_call_operand.vmem [shape: f32[8,32], index: 0, kind: input, shape index: {}]
  %s1 = inlined_call_operand.vmem [shape: f32[32,64], index: 1, kind: input, shape index: {}]
  %s2 = inlined_call_operand.vmem [shape: f32[1,64], index: 2, kind: input, shape index: {}]
  %s3 = inlined_call_operand.vmem [shape: f32[64,32], index: 3, kind: input, shape index: {}]
  %s4 = inlined_call_operand.vmem [shape: f32[1,32], index: 4, kind: input, shape index: {}]
  %s5 = inlined_call_operand.hbm [shape: f32[8,32], index: 5, kind: output, shape index: {}]
  %s6 = sld [smem:[#allocation0]]
  $region30: #{gatenu_forward.1} parent=0
    _
  %s8 = ssub.s32 1, %s6
  %s9 = scalar_select 0, %s8, %s6
  $region1: #{gatenu_forward.1} parent=0
    #allocation2 [shape = 'u8[4096]{0}', space=vmem, size = 0x1000, scoped, tag = 'output window, operand 0, single buffered']
    #allocation3 [shape = 's32[1]{0}', space=sflag, size = 0x4, scoped, tag = 'scoped memory for gatenu_forward.1']
    %10 = vsyncpa [#allocation3], 0
    // Predicated region
    $region2: #{gatenu_forward.1} parent=1 // pred_check
      _
    $region3: #{gatenu_forward.1} parent=1 // pred_check_branch
      %12 = sbr.rel (0) target = $region5
    $region4: #{gatenu_forward.1} parent=1 // pred_region
      _
    $region5: #{gatenu_forward.1} parent=1 // pred_fallthru
      _
    // Predicated region
    $region6: #{gatenu_forward.1} parent=1 // pred_check
      _
    $region7: #{gatenu_forward.1} parent=1 // pred_check_branch
      %14 = sbr.rel (0) target = $region9
    $region8: #{gatenu_forward.1} parent=1 // pred_region
      _
    $region9: #{gatenu_forward.1} parent=1 // pred_fallthru
      _
    // Predicated region
    $region10: #{gatenu_forward.1} parent=1 // pred_check
      _
    $region11: #{gatenu_forward.1} parent=1 // pred_check_branch
      %16 = sbr.rel (0) target = $region13
    $region12: #{gatenu_forward.1} parent=1 // pred_region
      _
    $region13: #{gatenu_forward.1} parent=1 // pred_fallthru
      _
    // Predicated region
    $region14: #{gatenu_forward.1} parent=1 // pred_check
      _
    $region15: #{gatenu_forward.1} parent=1 // pred_check_branch
      %18 = sbr.rel (0) target = $region17
    $region16: #{gatenu_forward.1} parent=1 // pred_region
      _
    $region17: #{gatenu_forward.1} parent=1 // pred_fallthru
      _
    // Predicated region
    $region18: #{gatenu_forward.1} parent=1 // pred_check
      _
    $region19: #{gatenu_forward.1} parent=1 // pred_check_branch
      %20 = sbr.rel (0) target = $region21
    $region20: #{gatenu_forward.1} parent=1 // pred_region
      _
    $region21: #{gatenu_forward.1} parent=1 // pred_fallthru
      _
    %v21 = vld [vmem:[%s0] sm:$0xff]
    %v22 = vld [vmem:[%s1] sm:$0xff]
    %v23 = vld [vmem:[%s1 + $0x8] sm:$0xff]
    %v24 = vld [vmem:[%s1 + $0x10] sm:$0xff]
    %v25 = vld [vmem:[%s1 + $0x18] sm:$0xff]
    %v26 = vld [vmem:[%s2] sm:$0x1]
    %v28 = vlaneseq
    %v29 = vshrl.u32 %v28, 7
    %v30 = vsub.s32 0, %v29
    %v31 = vrot.slane %v26, %v30
    %vm33 = vcmask 261120
    %v35 = vsel %vm33, %v21, 0
    %37 = vmatprep.subr.mxu0 0.0
    %38 = vmatpush1.msra.mxu0 %v22
    %39 = vmatprep.subr.mxu0 0.0
    %40 = vmatpush1.msra.mxu0 %v23
    %41 = vmatprep.subr.mxu0 0.0
    %42 = vmatpush1.msra.mxu0 %v24
    %43 = vmatprep.subr.mxu0 0.0
    %44 = vmatpush1.msra.mxu0 %v25
    %45 = vmatprep.subr.mxu0 0.0
    %46 = vmatpush1.msra.mxu0 0.0
    %47 = vmatprep.subr.mxu0 0.0
    %48 = vmatpush1.msra.mxu0 0.0
    %49 = vmatprep.subr.mxu0 0.0
    %50 = vmatpush1.msra.mxu0 0.0
    %51 = vmatprep.subr.mxu0 0.0
    %52 = vmatpush1.msra.mxu0 0.0
    %53 = vmatprep.subr.mxu0 0.0
    %54 = vmatpush1.msra.mxu0 0.0
    %55 = vmatprep.subr.mxu0 0.0
    %56 = vmatpush1.msra.mxu0 0.0
    %57 = vmatprep.subr.mxu0 0.0
    %58 = vmatpush1.msra.mxu0 0.0
    %59 = vmatprep.subr.mxu0 0.0
    %60 = vmatpush1.msra.mxu0 0.0
    %61 = vmatprep.subr.mxu0 0.0
    %62 = vmatpush1.msra.mxu0 0.0
    %63 = vmatprep.subr.mxu0 0.0
    %64 = vmatpush1.msra.mxu0 0.0
    %65 = vmatprep.subr.mxu0 0.0
    %66 = vmatpush1.msra.mxu0 0.0
    %67 = vmatprep.subr.mxu0 0.0
    %68 = vmatpush1.msra.mxu0 0.0
    %69 = vmatprep.subr.mxu0 0.0
    %70 = vmatpush1.msra.mxu0 0.0
    %71 = vmatprep.subr.mxu0 0.0
    %72 = vmatpush1.msra.mxu0 0.0
    %73 = vmatprep.subr.mxu0 0.0
    %74 = vmatpush1.msra.mxu0 0.0
    %75 = vmatprep.subr.mxu0 0.0
    %76 = vmatpush1.msra.mxu0 0.0
    %77 = vmatprep.subr.mxu0 0.0
    %78 = vmatpush1.msra.mxu0 0.0
    %79 = vmatprep.subr.mxu0 0.0
    %80 = vmatpush1.msra.mxu0 0.0
    %81 = vmatprep.subr.mxu0 0.0
    %82 = vmatpush1.msra.mxu0 0.0
    %83 = vmatprep.subr.mxu0 0.0
    %84 = vmatpush1.msra.mxu0 0.0
    %85 = vmatprep.subr.mxu0 0.0
    %86 = vmatpush1.msra.mxu0 0.0
    %87 = vmatprep.subr.mxu0 0.0
    %88 = vmatpush1.msra.mxu0 0.0
    %89 = vmatprep.subr.mxu0 0.0
    %90 = vmatpush1.msra.mxu0 0.0
    %91 = vmatprep.subr.mxu0 0.0
    %92 = vmatpush1.msra.mxu0 0.0
    %93 = vmatprep.subr.mxu0 0.0
    %94 = vmatpush1.msra.mxu0 0.0
    %95 = vmatprep.subr.mxu0 0.0
    %96 = vmatpush1.msra.mxu0 0.0
    %97 = vmatprep.subr.mxu0 0.0
    %98 = vmatpush1.msra.mxu0 0.0
    %99 = vmatprep.subr.mxu0 0.0
    %100 = vmatpush1.msra.mxu0 0.0
    %101 = vmatprep.mubr.f32.mxu0 0.0
    %102 = vmatmul.mubr.f32.gmra.mrb[0].mxu0 %v35
    %v103 = vpop.f32.mrb[0].mxu0
    %v104 = vadd.f32 %v31, %v103
    %v105 = vpop.f32.mrb[0].mxu0
    %106 = vdwg.mxu0
    %v107 = vmax.f32 %v104, 0.0
    %v108 = vld [vmem:[%s3] sm:$0xff]
    %v109 = vld [vmem:[%s3 + $0x8] sm:$0xff]
    %v110 = vld [vmem:[%s3 + $0x10] sm:$0xff]
    %v111 = vld [vmem:[%s3 + $0x18] sm:$0xff]
    %v112 = vld [vmem:[%s3 + $0x20] sm:$0xff]
    %v113 = vld [vmem:[%s3 + $0x28] sm:$0xff]
    %v114 = vld [vmem:[%s3 + $0x30] sm:$0xff]
    %v115 = vld [vmem:[%s3 + $0x38] sm:$0xff]
    %v116 = vld [vmem:[%s4] sm:$0x1]
    %v118 = vlaneseq
    %v119 = vshrl.u32 %v118, 7
    %v120 = vsub.s32 0, %v119
    %v121 = vrot.slane %v116, %v120
    %vm123 = vcmask 523264
    %v125 = vsel %vm123, %v107, 0
    %127 = vmatprep.subr.mxu0 0.0
    %128 = vmatpush1.msra.mxu0 %v108
    %129 = vmatprep.subr.mxu0 0.0
    %130 = vmatpush1.msra.mxu0 %v109
    %131 = vmatprep.subr.mxu0 0.0
    %132 = vmatpush1.msra.mxu0 %v110
    %133 = vmatprep.subr.mxu0 0.0
    %134 = vmatpush1.msra.mxu0 %v111
    %135 = vmatprep.subr.mxu0 0.0
    %136 = vmatpush1.msra.mxu0 %v112
    %137 = vmatprep.subr.mxu0 0.0
    %138 = vmatpush1.msra.mxu0 %v113
    %139 = vmatprep.subr.mxu0 0.0
    %140 = vmatpush1.msra.mxu0 %v114
    %141 = vmatprep.subr.mxu0 0.0
    %142 = vmatpush1.msra.mxu0 %v115
    %143 = vmatprep.subr.mxu0 0.0
    %144 = vmatpush1.msra.mxu0 0.0
    %145 = vmatprep.subr.mxu0 0.0
    %146 = vmatpush1.msra.mxu0 0.0
    %147 = vmatprep.subr.mxu0 0.0
    %148 = vmatpush1.msra.mxu0 0.0
    %149 = vmatprep.subr.mxu0 0.0
    %150 = vmatpush1.msra.mxu0 0.0
    %151 = vmatprep.subr.mxu0 0.0
    %152 = vmatpush1.msra.mxu0 0.0
    %153 = vmatprep.subr.mxu0 0.0
    %154 = vmatpush1.msra.mxu0 0.0
    %155 = vmatprep.subr.mxu0 0.0
    %156 = vmatpush1.msra.mxu0 0.0
    %157 = vmatprep.subr.mxu0 0.0
    %158 = vmatpush1.msra.mxu0 0.0
    %159 = vmatprep.subr.mxu0 0.0
    %160 = vmatpush1.msra.mxu0 0.0
    %161 = vmatprep.subr.mxu0 0.0
    %162 = vmatpush1.msra.mxu0 0.0
    %163 = vmatprep.subr.mxu0 0.0
    %164 = vmatpush1.msra.mxu0 0.0
    %165 = vmatprep.subr.mxu0 0.0
    %166 = vmatpush1.msra.mxu0 0.0
    %167 = vmatprep.subr.mxu0 0.0
    %168 = vmatpush1.msra.mxu0 0.0
    %169 = vmatprep.subr.mxu0 0.0
    %170 = vmatpush1.msra.mxu0 0.0
    %171 = vmatprep.subr.mxu0 0.0
    %172 = vmatpush1.msra.mxu0 0.0
    %173 = vmatprep.subr.mxu0 0.0
    %174 = vmatpush1.msra.mxu0 0.0
    %175 = vmatprep.subr.mxu0 0.0
    %176 = vmatpush1.msra.mxu0 0.0
    %177 = vmatprep.subr.mxu0 0.0
    %178 = vmatpush1.msra.mxu0 0.0
    %179 = vmatprep.subr.mxu0 0.0
    %180 = vmatpush1.msra.mxu0 0.0
    %181 = vmatprep.subr.mxu0 0.0
    %182 = vmatpush1.msra.mxu0 0.0
    %183 = vmatprep.subr.mxu0 0.0
    %184 = vmatpush1.msra.mxu0 0.0
    %185 = vmatprep.subr.mxu0 0.0
    %186 = vmatpush1.msra.mxu0 0.0
    %187 = vmatprep.subr.mxu0 0.0
    %188 = vmatpush1.msra.mxu0 0.0
    %189 = vmatprep.subr.mxu0 0.0
    %190 = vmatpush1.msra.mxu0 0.0
    %191 = vmatprep.mubr.f32.mxu0 0.0
    %192 = vmatmul.mubr.f32.gmra.mrb[0].mxu0 %v125
    %v193 = vpop.f32.mrb[0].mxu0
    %v194 = vadd.f32 %v121, %v193
    %v195 = vpop.f32.mrb[0].mxu0
    %196 = vdwg.mxu0
    %v197 = vsub.f32 0.0, %v194
    %v198 = vmul.f32 %v197, 1.442695
    %v199 = vpow.pop %v198
    %v200 = vadd.f32 %v199, 1.0
    %v201 = vrcp.pop %v200
    %v202 = vmul.f32 %v201, 2.0
    %203 = vst.msk [vmem:[#allocation2] sm:$0xff] %vm33, %v202
    // Predicated region
    $region22: #{gatenu_forward.1} parent=1 // pred_check
      _
    $region23: #{gatenu_forward.1} parent=1 // pred_check_branch
      %205 = sbr.rel (0) target = $region25
    $region24: #{gatenu_forward.1} parent=1 // pred_region
      %s207 = ssub.s32 128, 128
      %208 = vsyncadd [#allocation3], %s207
      %s210 = sshll.u32 [#allocation2], 4
      %s211 = int_to_ptr.vmem [resolvable:$true] %s210
      %213 = dma.vmem_to_hbm [thread:$0]  %s211, 128, %s5, [#allocation3]
    $region25: #{gatenu_forward.1} parent=1 // pred_fallthru
      _
    // Predicated region
    $region26: #{gatenu_forward.1} parent=1 // pred_check
      _
    $region27: #{gatenu_forward.1} parent=1 // pred_check_branch
      %215 = sbr.rel (0) target = $region29
    $region28: #{gatenu_forward.1} parent=1 // pred_region
      %216 = dma.done [#allocation3], 128
    $region29: #{gatenu_forward.1} parent=1 // pred_fallthru
      _
    %217 = vsyncpa [#allocation3], 1

</llo_original>
